<compile_context>
chip_gen: v7x
topology: tpu7x:2x2x1
jax: 0.10.0
libtpu: 0.0.40
codegen_flags: <defaults>
</compile_context>

<pallas_src>
import jax
import jax.numpy as jnp
from jax.experimental import pallas as pl
from jax.experimental.pallas import tpu as pltpu

_ELEM_BYTES = 4  # float32


def heliity_kernel(lam_ref, x_ref, o_ref):
    # lam_ref: (1,) f32 in SMEM                 -- scalar parameter lambda_theta
    # x_ref:   (3, TILE_R, TILE_C) f32 in VMEM  -- x[0], x[1], x[2] tile
    # o_ref:   (2, TILE_R, TILE_C) f32 in VMEM  -- [f*x1 ; f*x2] tile
    lam = lam_ref[0]
    x0 = x_ref[0]
    f = 1.0 + lam * (x0 * x0)      # VPU elementwise; compute is free vs. DMA
    o_ref[0] = f * x_ref[1]        # top half of the vstack
    o_ref[1] = f * x_ref[2]        # bottom half of the vstack


def _vmem_capacity_bytes():
    try:
        return int(pltpu.get_tpu_info().vmem_capacity_bytes)
    except Exception:
        return 64 << 20            # conservative fallback = v7x per-TC VMEM


def _is_multicore_v7():
    try:
        kind = jax.devices()[0].device_kind.lower()
    except Exception:
        return False
    return ("v7" in kind) or ("7x" in kind)


def _pick_tiles(R, C, force_row_split):
    """Pick (TILE_R, TILE_C) for a purely HBM-bandwidth-bound elementwise op.

    Working set = 5 slabs (3 input + 2 output channels), double-buffered by
    the pipeline (10 resident slabs) plus the in-kernel 'f' temp.  Budget:
    ~60% of this generation's VMEM across those 10 slabs, capped at 4 MiB per
    slab (measured tiled-f32-stream data: slabs of this class already reach
    ~85% of the HBM roofline and hide the per-grid-step pipeline overhead).
    """
    cap = _vmem_capacity_bytes()
    slab_budget = min(4 << 20, (cap * 6) // 100)

    # Lane (C) tiling: only needed when even an 8-row slab at full width busts
    # the budget, and only legal (lane-dense) when C is 128-aligned.
    if C % 128 == 0 and 8 * C * _ELEM_BYTES > slab_budget:
        tile_c = max(128, (slab_budget // (8 * _ELEM_BYTES)) // 128 * 128)
        tile_c = min(tile_c, C)
    else:
        # Full-extent C is always a legal block shape.  If C in real use were
        # huge AND not 128-aligned, pad/reshape to a 128-wide layout upstream.
        tile_c = C

    # Row tiling: biggest multiple of 8 (or full R) that keeps the slab inside
    # the budget.
    rows_cap = max(8, (slab_budget // max(tile_c * _ELEM_BYTES, 1)) // 8 * 8)
    tile_r = R if R <= rows_cap else rows_cap

    # On multi-TensorCore chips (v7x) make sure the core-parallel row axis has
    # at least 2 steps so both cores get rows to stream.
    if force_row_split and R >= 16:
        if (R + tile_r - 1) // tile_r < 2:
            half = ((R + 1) // 2 + 7) // 8 * 8
            tile_r = min(tile_r, half)

    return tile_r, tile_c


def heliity1d(x, lambda_theta, *, tile_r=None, tile_c=None):
    """x: (3, R, C) float32.  Returns (2*R, C) float32 (== torch.vstack)."""
    assert x.ndim == 3 and x.shape[0] == 3
    _, R, C = x.shape

    multicore = _is_multicore_v7()
    auto_r, auto_c = _pick_tiles(R, C, force_row_split=multicore)
    tile_r = auto_r if tile_r is None else tile_r
    tile_c = auto_c if tile_c is None else tile_c

    grid_r = (R + tile_r - 1) // tile_r
    grid_c = (C + tile_c - 1) // tile_c
    grid = (grid_r, grid_c)

    # VMEM budget: 10 resident slabs (5 arrays x 2 pipeline buffers) + headroom
    # for the in-kernel 'f' temporary, never above the physical capacity.
    cap = _vmem_capacity_bytes()
    slab_bytes = tile_r * tile_c * _ELEM_BYTES
    vmem_limit = min(cap, max(32 << 20, 10 * slab_bytes + (8 << 20)))

    # Engage both TensorCores on v7x: core-shard the row axis when it has an
    # even number (>= 2) of steps.  Plain PARALLEL elsewhere (no-op on 1-TC
    # v5e/v6e, harmless everywhere).
    use_core_parallel = multicore and grid_r >= 2 and grid_r % 2 == 0
    row_sem = pltpu.CORE_PARALLEL if use_core_parallel else pltpu.PARALLEL
    dim_sem = (row_sem, pltpu.PARALLEL)

    lam = jnp.asarray(lambda_theta, jnp.float32).reshape((1,))

    out2 = pl.pallas_call(
        heliity_kernel,
        out_shape=jax.ShapeDtypeStruct((2, R, C), x.dtype),
        grid=grid,
        in_specs=[
            # scalar parameter, whole (1,) array in SMEM every step
            pl.BlockSpec(memory_space=pltpu.MemorySpace.SMEM),
            # (row, lane) tile of all three input channels
            pl.BlockSpec((3, tile_r, tile_c), lambda i, j: (0, i, j)),
        ],
        out_specs=pl.BlockSpec((2, tile_r, tile_c), lambda i, j: (0, i, j)),
        compiler_params=pltpu.CompilerParams(
            dimension_semantics=dim_sem,
            vmem_limit_bytes=int(vmem_limit),
        ),
        cost_estimate=pl.CostEstimate(
            flops=5 * R * C,                       # 3 for f, 2 for the scales
            transcendentals=0,
            bytes_accessed=5 * R * C * _ELEM_BYTES,  # 3 reads + 2 writes
        ),
    )(lam, x)

    # (2, R, C) -> (2R, C): contiguous reshape, identical to torch.vstack.
    return out2.reshape(2 * R, C)


if __name__ == "__main__":
    key = jax.random.PRNGKey(0)
    k_x, k_lam, k_x2, k_x3 = jax.random.split(key, 4)

    def reference(x, lam):
        f = 1.0 + lam * x[0] ** 2
        return jnp.vstack((f * x[1], f * x[2]))

    # Deterministic stand-in for torch.randn(()) parameter lambda_theta.
    lambda_theta = jax.random.normal(k_lam, (), dtype=jnp.float32)

    # Small shape consistent with the forward: leading dim 3 (x[0], x[1], x[2]),
    # each slice one (8, 128) f32 vreg tile.
    x = jax.random.normal(k_x, (3, 8, 128), dtype=jnp.float32)
    out = jax.block_until_ready(heliity1d(x, lambda_theta))
    assert out.shape == (16, 128)
    assert jnp.allclose(out, reference(x, lambda_theta), atol=1e-6, rtol=1e-6)

    # Gridded / pipelined path: multiple full row tiles.
    x2 = jax.random.normal(k_x2, (3, 64, 128), dtype=jnp.float32)
    out2 = jax.block_until_ready(heliity1d(x2, lambda_theta, tile_r=16))
    assert out2.shape == (128, 128)
    assert jnp.allclose(out2, reference(x2, lambda_theta), atol=1e-6, rtol=1e-6)

    # Partial last row tile (R % tile_r != 0) exercises masked writeback.
    x3 = jax.random.normal(k_x3, (3, 24, 128), dtype=jnp.float32)
    out3 = jax.block_until_ready(heliity1d(x3, lambda_theta, tile_r=16))
    assert out3.shape == (48, 128)
    assert jnp.allclose(out3, reference(x3, lambda_theta), atol=1e-6, rtol=1e-6)

    print("KERNEL_OK")
</pallas_src>

<mosaic_0001>
module attributes {stable_mosaic.version = 11 : i64} {
  func.func @heliity_kernel(%arg0: i32, %arg1: i32, %arg2: memref<1xf32, #tpu.memory_space<smem>>, %arg3: memref<3x8x128xf32, #tpu.memory_space<vmem>>, %arg4: memref<2x8x128xf32, #tpu.memory_space<vmem>>) attributes {dimension_semantics = [#tpu.dimension_semantics<parallel>, #tpu.dimension_semantics<parallel>], iteration_bounds = array<i64: 1, 1>, scalar_prefetch = 0 : i64, scratch_operands = 0 : i64, tpu.core_type = #tpu.core_type<tc>, window_params = [{transform_indices = @transform_0, window_bounds = array<i64: 1>}, {transform_indices = @transform_1, window_bounds = array<i64: 3, 8, 128>}, {transform_indices = @transform_2, window_bounds = array<i64: 2, 8, 128>}]} {
    %c0 = arith.constant 0 : index
    %0 = memref.load %arg2[%c0] : memref<1xf32, #tpu.memory_space<smem>>
    %c0_0 = arith.constant 0 : index
    %c0_1 = arith.constant 0 : index
    %c0_2 = arith.constant 0 : index
    %1 = vector.load %arg3[%c0_0, %c0_1, %c0_2] : memref<3x8x128xf32, #tpu.memory_space<vmem>>, vector<1x8x128xf32>
    %2 = vector.shape_cast %1 : vector<1x8x128xf32> to vector<8x128xf32>
    %3 = arith.mulf %2, %2 : vector<8x128xf32>
    %4 = vector.broadcast %0 : f32 to vector<8x128xf32>
    %5 = arith.mulf %4, %3 : vector<8x128xf32>
    %cst = arith.constant 1.000000e+00 : f32
    %6 = vector.broadcast %cst : f32 to vector<8x128xf32>
    %7 = arith.addf %6, %5 : vector<8x128xf32>
    %c1 = arith.constant 1 : index
    %c0_3 = arith.constant 0 : index
    %c0_4 = arith.constant 0 : index
    %8 = vector.load %arg3[%c1, %c0_3, %c0_4] : memref<3x8x128xf32, #tpu.memory_space<vmem>>, vector<1x8x128xf32>
    %9 = vector.shape_cast %8 : vector<1x8x128xf32> to vector<8x128xf32>
    %10 = arith.mulf %7, %9 : vector<8x128xf32>
    %c0_5 = arith.constant 0 : index
    %c0_6 = arith.constant 0 : index
    %c0_7 = arith.constant 0 : index
    %11 = vector.load %arg4[%c0_5, %c0_6, %c0_7] : memref<2x8x128xf32, #tpu.memory_space<vmem>>, vector<1x8x128xf32>
    %12 = vector.shape_cast %11 : vector<1x8x128xf32> to vector<8x128xf32>
    %13 = vector.shape_cast %10 : vector<8x128xf32> to vector<1x8x128xf32>
    tpu.vector_store %arg4[%c0_5, %c0_6, %c0_7], %13 {strides = array<i32>} : memref<2x8x128xf32, #tpu.memory_space<vmem>>, vector<1x8x128xf32>,
    %c2 = arith.constant 2 : index
    %c0_8 = arith.constant 0 : index
    %c0_9 = arith.constant 0 : index
    %14 = vector.load %arg3[%c2, %c0_8, %c0_9] : memref<3x8x128xf32, #tpu.memory_space<vmem>>, vector<1x8x128xf32>
    %15 = vector.shape_cast %14 : vector<1x8x128xf32> to vector<8x128xf32>
    %16 = arith.mulf %7, %15 : vector<8x128xf32>
    %c1_10 = arith.constant 1 : index
    %c0_11 = arith.constant 0 : index
    %c0_12 = arith.constant 0 : index
    %17 = vector.load %arg4[%c1_10, %c0_11, %c0_12] : memref<2x8x128xf32, #tpu.memory_space<vmem>>, vector<1x8x128xf32>
    %18 = vector.shape_cast %17 : vector<1x8x128xf32> to vector<8x128xf32>
    %19 = vector.shape_cast %16 : vector<8x128xf32> to vector<1x8x128xf32>
    tpu.vector_store %arg4[%c1_10, %c0_11, %c0_12], %19 {strides = array<i32>} : memref<2x8x128xf32, #tpu.memory_space<vmem>>, vector<1x8x128xf32>,
    return
  }
  func.func @transform_0(%arg0: i32, %arg1: i32) -> i32 {
    %c0_i32 = arith.constant 0 : i32
    %c0_i32_0 = arith.constant 0 : i32
    return %c0_i32 : i32
  }
  func.func @transform_1(%arg0: i32, %arg1: i32) -> (i32, i32, i32) {
    %c0_i32 = arith.constant 0 : i32
    %c0_i32_0 = arith.constant 0 : i32
    return %c0_i32, %arg0, %arg1 : i32, i32, i32
  }
  func.func @transform_2(%arg0: i32, %arg1: i32) -> (i32, i32, i32) {
    %c0_i32 = arith.constant 0 : i32
    %c0_i32_0 = arith.constant 0 : i32
    return %c0_i32, %arg0, %arg1 : i32, i32, i32
  }
}

</mosaic_0001>

<llo_original>
// kernel: tpu_custom_call.1
$region0: #{tpu_custom_call.1}
  #allocation0 [shape = 'u32[]', space=smem, size = 0x4, offset = 0x4, fixed_abs, tag = 'smem constant byte address 0x4 - core index']
  #allocation1 [shape = 'u32[144,128]{1,0:T(1,128)}', space=vmem, size = 0x12000, scoped, tag = 'internal scratch']
  #allocation2 [shape = 'f32[1]{0:T(128)S(6)}', space=smem, size = 0x200, scoped, tag = 'scoped memory for tpu_custom_call.1']
  %s0 = inlined_call_operand.<no memory space> [shape: f32[1], index: 0, kind: input, shape index: {}]
  %s1 = inlined_call_operand.hbm [shape: f32[3,8,128], index: 1, kind: input, shape index: {}]
  %s2 = inlined_call_operand.hbm [shape: f32[2,8,128], index: 2, kind: output, shape index: {}]
  %s3 = sld [smem:[#allocation0]]
  $region22: #{tpu_custom_call.1} parent=0
    _
  %s5 = ssub.s32 1, %s3
  %s6 = scalar_select 0, %s5, %s3
  %7 = sst [smem:[#allocation2]] %s0
  $region1: #{tpu_custom_call.1} parent=0
    #allocation3 [shape = 'u8[12288]{0}', space=vmem, size = 0x3000, scoped, tag = 'input window, operand 1, single buffered']
    #allocation4 [shape = 's32[1]{0}', space=sflag, size = 0x4, scoped, tag = 'scoped memory for tpu_custom_call.1']
    #allocation5 [shape = 's32[1]{0}', space=sflag, size = 0x4, scoped, tag = 'scoped memory for tpu_custom_call.1']
    #allocation6 [shape = 'u8[8192]{0}', space=vmem, size = 0x2000, scoped, tag = 'output window, operand 0, single buffered']
    %8 = vsyncpa [#allocation4], 0
    %9 = vsyncpa [#allocation5], 0
    // Predicated region
    $region2: #{tpu_custom_call.1} parent=1 // pred_check
      _
    $region3: #{tpu_custom_call.1} parent=1 // pred_check_branch
      %11 = sbr.rel (0) target = $region5
    $region4: #{tpu_custom_call.1} parent=1 // pred_region
      _
    $region5: #{tpu_custom_call.1} parent=1 // pred_fallthru
      _
    // Predicated region
    $region6: #{tpu_custom_call.1} parent=1 // pred_check
      _
    $region7: #{tpu_custom_call.1} parent=1 // pred_check_branch
      %13 = sbr.rel (0) target = $region9
    $region8: #{tpu_custom_call.1} parent=1 // pred_region
      %s15 = ssub.s32 384, 384
      %16 = vsyncadd [#allocation4], %s15
      %s17 = sshll.u32 [#allocation3], 4
      %s18 = int_to_ptr.vmem [resolvable:$true] %s17
      %23 = dma.hbm_to_vmem [thread:$0]  %s1, 384, %s18, [#allocation4], 128, 128, 8
    $region9: #{tpu_custom_call.1} parent=1 // pred_fallthru
      _
    // Predicated region
    $region10: #{tpu_custom_call.1} parent=1 // pred_check
      _
    $region11: #{tpu_custom_call.1} parent=1 // pred_check_branch
      %25 = sbr.rel (0) target = $region13
    $region12: #{tpu_custom_call.1} parent=1 // pred_region
      %26 = dma.done [#allocation4], 384
    $region13: #{tpu_custom_call.1} parent=1 // pred_fallthru
      _
    %s27 = sld [smem:[#allocation2]]
    %v28 = vld [vmem:[#allocation3] sm:$0xff]
    %v29 = vmul.f32 %v28, %v28
    %v30 = vstv %s27
    %v31 = vmul.f32 %v30, %v29
    %v32 = vadd.f32 %v31, 1.0
    %s33 = scalar_lea.vmem [#allocation3], 8
    %v34 = vld [vmem:[%s33] sm:$0xff]
    %v35 = vmul.f32 %v32, %v34
    %36 = vst [vmem:[#allocation6] sm:$0xff] %v35
    %s37 = scalar_lea.vmem [#allocation3], 16
    %v38 = vld [vmem:[%s37] sm:$0xff]
    %v39 = vmul.f32 %v32, %v38
    %s40 = scalar_lea.vmem [#allocation6], 8
    %41 = vst [vmem:[%s40] sm:$0xff] %v39
    // Predicated region
    $region14: #{tpu_custom_call.1} parent=1 // pred_check
      _
    $region15: #{tpu_custom_call.1} parent=1 // pred_check_branch
      %43 = sbr.rel (0) target = $region17
    $region16: #{tpu_custom_call.1} parent=1 // pred_region
      %s45 = ssub.s32 256, 256
      %46 = vsyncadd [#allocation5], %s45
      %s47 = sshll.u32 [#allocation6], 4
      %s48 = int_to_ptr.vmem [resolvable:$true] %s47
      %53 = dma.vmem_to_hbm [thread:$0]  %s48, 256, %s2, [#allocation5], 128, 128, 8
    $region17: #{tpu_custom_call.1} parent=1 // pred_fallthru
      _
    // Predicated region
    $region18: #{tpu_custom_call.1} parent=1 // pred_check
      _
    $region19: #{tpu_custom_call.1} parent=1 // pred_check_branch
      %55 = sbr.rel (0) target = $region21
    $region20: #{tpu_custom_call.1} parent=1 // pred_region
      %56 = dma.done [#allocation5], 256
    $region21: #{tpu_custom_call.1} parent=1 // pred_fallthru
      _
    %57 = vsyncpa [#allocation4], 1
    %58 = vsyncpa [#allocation5], 1

</llo_original>
